<compile_context>
chip_gen: v7x
topology: tpu7x:2x2x1
jax: 0.10.0
libtpu: 0.0.40
codegen_flags: <defaults>
</compile_context>

<pallas_src>
import functools

import jax
import jax.numpy as jnp
from jax import lax
from jax.experimental import pallas as pl
from jax.experimental.pallas import tpu as pltpu


def _round_up(x, m):
    return (x + m - 1) // m * m


def _vmem_limit_bytes(TB, Cp, Hp, H2p, NCp, n_stack):
    """Explicit VMEM budget for the fused kernel (bytes)."""
    bf16, f32 = 2, 4
    weights = (Cp * Hp + n_stack * Hp * Hp + Hp * H2p + H2p * H2p
               + H2p * NCp) * bf16                       # single-buffered
    biases = (Hp + n_stack * Hp + 2 * H2p + NCp) * f32   # single-buffered
    inp = 2 * TB * Cp * bf16                             # input block, 2 bufs
    outs = 2 * TB * (NCp + H2p) * f32                    # output blocks, 2 bufs
    acts = 4 * TB * Hp * f32                             # live acts + casts
    need = weights + biases + inp + outs + acts
    # 1.5x headroom + 4 MiB; floor 32 MiB; cap 48 MiB (safe on v7x's 64 MiB
    # physical VMEM as well as v5e/v6e's 128 MiB).
    return int(min(max(need * 3 // 2 + (4 << 20), 32 << 20), 48 << 20))


# ----------------------------------------------------------------------------
# Fused Pallas forward: full MLP stack, activations kept in VMEM.
# ----------------------------------------------------------------------------
def mlp_forward(x, params, *, n_hidden, n_layers, num_classes, block_b=256):
    """x: NCHW feature map [B, C, H, W] -> (logits [B, num_classes],
    adapted features [B, n_hidden//2])."""
    B, C, H, W = x.shape
    HW = H * W

    # Padded sizes are baked into the (already padded) kernel params.
    Cp = params["w_in"].shape[0]
    Hp = params["w_in"].shape[1]
    H2p = params["a2_w"].shape[1]
    NCp = params["out_w"].shape[1]
    has_hidden = n_layers > 0
    n_stack = params["w_hid"].shape[0] if has_hidden else 0

    # Batch tiling: >= 2 grid steps whenever possible so the "parallel" batch
    # axis shards across both v7x TensorCores; 256-row tiles for big batches
    # (v6e/v7x 256-wide MXU).  v5e (128-wide MXU) is also fine with these.
    Bp = _round_up(max(B, 8), 8)
    if Bp > block_b:
        TB = block_b
    elif Bp >= 16:
        TB = _round_up(Bp // 2, 8)
    else:
        TB = Bp
    Bp = _round_up(Bp, TB)

    # AdaptiveAvgPool2d(1) + Flatten hoisted to the wrapper (tiny XLA reduce):
    # kernel input becomes a lane-dense [Bp, Cp] bf16 matrix.
    pooled = x.reshape(B, C, HW).mean(axis=-1)                 # f32 [B, C]
    pooled = jnp.pad(pooled, ((0, Bp - B), (0, Cp - C))).astype(jnp.bfloat16)

    def kernel(x_ref, *refs):
        if has_hidden:
            (w_in, b_in, w_hid, b_hid, a1w, a1b, a2w, a2b, ow, ob,
             logits_ref, feat_ref) = refs
        else:
            (w_in, b_in, a1w, a1b, a2w, a2b, ow, ob,
             logits_ref, feat_ref) = refs
            w_hid = b_hid = None

        def dense(h, w, b, relu):
            # bf16 MXU matmul, f32 accumulation; BN already folded into (w, b).
            y = jnp.dot(h.astype(jnp.bfloat16), w,
                        preferred_element_type=jnp.float32) + b
            return jnp.maximum(y, 0.0) if relu else y

        # in_layer + in_norm(folded) + ReLU
        h = dense(x_ref[...], w_in[...], b_in[...], relu=True)

        # n_layers x [Linear + BN(folded) + ReLU]  (Dropout = identity in eval)
        if has_hidden:
            if n_layers <= 3:                      # tiny stack: static unroll
                for l in range(n_layers):
                    h = dense(h, w_hid[l], b_hid[l], relu=True)
            else:                                  # bound live ranges
                h = lax.fori_loop(
                    0, n_layers,
                    lambda l, hh: dense(hh, w_hid[l], b_hid[l], relu=True),
                    h)

        # adaptation: Linear+BN+ReLU (+Dropout id) -> Linear+ReLU
        h = dense(h, a1w[...], a1b[...], relu=True)
        h = dense(h, a2w[...], a2b[...], relu=True)
        feat_ref[...] = h.astype(feat_ref.dtype)

        # out_class: Linear (no activation)
        logits_ref[...] = dense(h, ow[...], ob[...],
                                relu=False).astype(logits_ref.dtype)

    # Grid-invariant weights/biases: single-buffered (index never changes).
    def wspec2(shape):
        return pl.BlockSpec(shape, lambda i: (0, 0),
                            pipeline_mode=pl.Buffered(1))

    def wspec3(shape):
        return pl.BlockSpec(shape, lambda i: (0, 0, 0),
                            pipeline_mode=pl.Buffered(1))

    in_specs = [pl.BlockSpec((TB, Cp), lambda i: (i, 0)),      # pooled input
                wspec2((Cp, Hp)),                              # w_in (bf16)
                wspec2((1, Hp))]                               # b_in
    args = [pooled, params["w_in"], params["b_in"]]
    if has_hidden:
        in_specs += [wspec3((n_stack, Hp, Hp)),                # hidden W stack
                     wspec3((n_stack, 1, Hp))]                 # hidden b stack
        args += [params["w_hid"], params["b_hid"]]
    in_specs += [wspec2((Hp, H2p)), wspec2((1, H2p)),          # a1
                 wspec2((H2p, H2p)), wspec2((1, H2p)),         # a2
                 wspec2((H2p, NCp)), wspec2((1, NCp))]         # out_class
    args += [params["a1_w"], params["a1_b"], params["a2_w"], params["a2_b"],
             params["out_w"], params["out_b"]]

    logits, feats = pl.pallas_call(
        kernel,
        out_shape=(jax.ShapeDtypeStruct((Bp, NCp), jnp.float32),
                   jax.ShapeDtypeStruct((Bp, H2p), jnp.float32)),
        grid=(Bp // TB,),
        in_specs=in_specs,
        out_specs=(pl.BlockSpec((TB, NCp), lambda i: (i, 0)),
                   pl.BlockSpec((TB, H2p), lambda i: (i, 0))),
        compiler_params=pltpu.CompilerParams(
            dimension_semantics=("parallel",),
            vmem_limit_bytes=_vmem_limit_bytes(TB, Cp, Hp, H2p, NCp, n_stack)),
    )(*args)

    return logits[:B, :num_classes], feats[:B, :n_hidden // 2]


# ----------------------------------------------------------------------------
# Parameters: PyTorch-default-style init, then BN folding + padding + bf16.
# ----------------------------------------------------------------------------
def _linear_init(key, fan_in, fan_out):
    kw, kb = jax.random.split(key)
    bound = 1.0 / jnp.sqrt(float(fan_in))
    w = jax.random.uniform(kw, (fan_in, fan_out), jnp.float32, -bound, bound)
    b = jax.random.uniform(kb, (fan_out,), jnp.float32, -bound, bound)
    return w, b


def _bn_init(key, n, eps=1e-5):
    kg, kb, km, kv = jax.random.split(key, 4)
    gamma = 1.0 + 0.1 * jax.random.normal(kg, (n,), jnp.float32)
    beta = 0.1 * jax.random.normal(kb, (n,), jnp.float32)
    running_mean = 0.05 * jax.random.normal(km, (n,), jnp.float32)
    running_var = jnp.abs(1.0 + 0.1 * jax.random.normal(kv, (n,), jnp.float32))
    return gamma, beta, running_mean, running_var, eps


def build_raw_params(key, in_features, n_hidden, n_layers, num_classes):
    keys = jax.random.split(key, 6 + 2 * n_layers)
    ki = iter(keys)
    p = {}
    p["in_w"], p["in_b"] = _linear_init(next(ki), in_features, n_hidden)
    p["in_bn"] = _bn_init(next(ki), n_hidden)
    p["hidden"] = []
    for _ in range(n_layers):
        w, b = _linear_init(next(ki), n_hidden, n_hidden)
        bn = _bn_init(next(ki), n_hidden)
        p["hidden"].append((w, b, bn))
    h2 = n_hidden // 2
    p["a1_w"], p["a1_b"] = _linear_init(next(ki), n_hidden, h2)
    p["a1_bn"] = _bn_init(next(ki), h2)
    p["a2_w"], p["a2_b"] = _linear_init(next(ki), h2, h2)
    p["out_w"], p["out_b"] = _linear_init(next(ki), h2, num_classes)
    return p


def _fold_bn(w, b, bn):
    gamma, beta, mean, var, eps = bn
    scale = gamma / jnp.sqrt(var + eps)
    return w * scale[None, :], b * scale + (beta - mean * scale)


def _pad2(w, rows, cols):
    return jnp.pad(w, ((0, rows - w.shape[0]), (0, cols - w.shape[1])))


def _pad1(b, cols):
    return jnp.pad(b, (0, cols - b.shape[0])).reshape(1, cols)


def prepare_kernel_params(raw, in_features, n_hidden, n_layers, num_classes):
    """Fold eval-mode BN into the Linears, pad every feature dim to a lane
    multiple (128), store weights in bf16 (biases stay f32)."""
    Cp = _round_up(in_features, 128)     # lane dim of the pooled input block
    Hp = _round_up(n_hidden, 128)
    H2p = _round_up(n_hidden // 2, 128)
    NCp = _round_up(num_classes, 128)

    p = {}
    w, b = _fold_bn(raw["in_w"], raw["in_b"], raw["in_bn"])
    p["w_in"] = _pad2(w, Cp, Hp).astype(jnp.bfloat16)
    p["b_in"] = _pad1(b, Hp)

    if n_layers > 0:                     # no dummy stack when n_layers == 0
        wl, bl = [], []
        for (w, b, bn) in raw["hidden"]:
            w, b = _fold_bn(w, b, bn)
            wl.append(_pad2(w, Hp, Hp).astype(jnp.bfloat16))
            bl.append(_pad1(b, Hp))
        p["w_hid"] = jnp.stack(wl)
        p["b_hid"] = jnp.stack(bl)

    w, b = _fold_bn(raw["a1_w"], raw["a1_b"], raw["a1_bn"])
    p["a1_w"] = _pad2(w, Hp, H2p).astype(jnp.bfloat16)
    p["a1_b"] = _pad1(b, H2p)
    p["a2_w"] = _pad2(raw["a2_w"], H2p, H2p).astype(jnp.bfloat16)
    p["a2_b"] = _pad1(raw["a2_b"], H2p)
    p["out_w"] = _pad2(raw["out_w"], H2p, NCp).astype(jnp.bfloat16)
    p["out_b"] = _pad1(raw["out_b"], NCp)
    return p


# ----------------------------------------------------------------------------
# Pure-JAX reference (f32) for correctness checking.
# ----------------------------------------------------------------------------
def mlp_forward_ref(x, raw):
    B, C, H, W = x.shape
    h = x.reshape(B, C, H * W).mean(-1)

    def bn(v, p):
        g, be, m, var, eps = p
        return (v - m) / jnp.sqrt(var + eps) * g + be

    h = jnp.maximum(bn(h @ raw["in_w"] + raw["in_b"], raw["in_bn"]), 0.0)
    for (w, b, p) in raw["hidden"]:
        h = jnp.maximum(bn(h @ w + b, p), 0.0)
    h = jnp.maximum(bn(h @ raw["a1_w"] + raw["a1_b"], raw["a1_bn"]), 0.0)
    h = jnp.maximum(h @ raw["a2_w"] + raw["a2_b"], 0.0)
    c = h @ raw["out_w"] + raw["out_b"]
    return c, h


# ----------------------------------------------------------------------------
if __name__ == "__main__":
    key = jax.random.PRNGKey(0)
    k_x, k_p = jax.random.split(key)

    B, C, H, W = 2, 4, 16, 16          # backbone feature map (NCHW)
    n_hidden, n_layers, num_classes = 32, 2, 10

    x = jax.random.normal(k_x, (B, C, H, W), jnp.float32)
    raw = build_raw_params(k_p, in_features=C, n_hidden=n_hidden,
                           n_layers=n_layers, num_classes=num_classes)
    kparams = prepare_kernel_params(raw, C, n_hidden, n_layers, num_classes)

    fwd = jax.jit(functools.partial(mlp_forward, n_hidden=n_hidden,
                                    n_layers=n_layers,
                                    num_classes=num_classes))
    c, h = fwd(x, kparams)
    jax.block_until_ready((c, h))

    assert c.shape == (B, num_classes), c.shape
    assert h.shape == (B, n_hidden // 2), h.shape

    # Numerical check against the pure-JAX f32 reference (bf16 matmul path).
    c_ref, h_ref = mlp_forward_ref(x, raw)
    err_c = float(jnp.max(jnp.abs(c - c_ref)))
    err_h = float(jnp.max(jnp.abs(h - h_ref)))
    assert err_c < 5e-2 and err_h < 5e-2, (err_c, err_h)

    print("KERNEL_OK")
</pallas_src>

<mosaic_0001>
module attributes {stable_mosaic.version = 11 : i64} {
  func.func @kernel(%arg0: i32, %arg1: memref<8x128xbf16, #tpu.memory_space<vmem>>, %arg2: memref<128x128xbf16, #tpu.memory_space<vmem>>, %arg3: memref<1x128xf32, #tpu.memory_space<vmem>>, %arg4: memref<2x128x128xbf16, #tpu.memory_space<vmem>>, %arg5: memref<2x1x128xf32, #tpu.memory_space<vmem>>, %arg6: memref<128x128xbf16, #tpu.memory_space<vmem>>, %arg7: memref<1x128xf32, #tpu.memory_space<vmem>>, %arg8: memref<128x128xbf16, #tpu.memory_space<vmem>>, %arg9: memref<1x128xf32, #tpu.memory_space<vmem>>, %arg10: memref<128x128xbf16, #tpu.memory_space<vmem>>, %arg11: memref<1x128xf32, #tpu.memory_space<vmem>>, %arg12: memref<8x128xf32, #tpu.memory_space<vmem>>, %arg13: memref<8x128xf32, #tpu.memory_space<vmem>>) attributes {dimension_semantics = [#tpu.dimension_semantics<parallel>], iteration_bounds = array<i64: 1>, scalar_prefetch = 0 : i64, scratch_operands = 0 : i64, tpu.core_type = #tpu.core_type<tc>, window_params = [{transform_indices = @transform_0, window_bounds = array<i64: 8, 128>}, {pipeline_mode = #tpu.pipeline_mode<synchronous>, transform_indices = @transform_1, window_bounds = array<i64: 128, 128>}, {pipeline_mode = #tpu.pipeline_mode<synchronous>, transform_indices = @transform_2, window_bounds = array<i64: 1, 128>}, {pipeline_mode = #tpu.pipeline_mode<synchronous>, transform_indices = @transform_3, window_bounds = array<i64: 2, 128, 128>}, {pipeline_mode = #tpu.pipeline_mode<synchronous>, transform_indices = @transform_4, window_bounds = array<i64: 2, 1, 128>}, {pipeline_mode = #tpu.pipeline_mode<synchronous>, transform_indices = @transform_5, window_bounds = array<i64: 128, 128>}, {pipeline_mode = #tpu.pipeline_mode<synchronous>, transform_indices = @transform_6, window_bounds = array<i64: 1, 128>}, {pipeline_mode = #tpu.pipeline_mode<synchronous>, transform_indices = @transform_7, window_bounds = array<i64: 128, 128>}, {pipeline_mode = #tpu.pipeline_mode<synchronous>, transform_indices = @transform_8, window_bounds = array<i64: 1, 128>}, {pipeline_mode = #tpu.pipeline_mode<synchronous>, transform_indices = @transform_9, window_bounds = array<i64: 128, 128>}, {pipeline_mode = #tpu.pipeline_mode<synchronous>, transform_indices = @transform_10, window_bounds = array<i64: 1, 128>}, {transform_indices = @transform_11, window_bounds = array<i64: 8, 128>}, {transform_indices = @transform_12, window_bounds = array<i64: 8, 128>}]} {
    %c0 = arith.constant 0 : index
    %c0_0 = arith.constant 0 : index
    %0 = vector.load %arg1[%c0, %c0_0] : memref<8x128xbf16, #tpu.memory_space<vmem>>, vector<8x128xbf16>
    %c0_1 = arith.constant 0 : index
    %c0_2 = arith.constant 0 : index
    %1 = vector.load %arg2[%c0_1, %c0_2] : memref<128x128xbf16, #tpu.memory_space<vmem>>, vector<128x128xbf16>
    %c0_3 = arith.constant 0 : index
    %c0_4 = arith.constant 0 : index
    %2 = vector.load %arg3[%c0_3, %c0_4] : memref<1x128xf32, #tpu.memory_space<vmem>>, vector<1x128xf32>
    %cst = arith.constant dense<0.000000e+00> : vector<8x128xf32>
    %3 = tpu.matmul %0, %1, %cst {dimension_numbers = #tpu.dot_dimension_numbers<[1], [0], [0], [1], [0, 0, 1, 1], [], []>} : vector<8x128xbf16>, vector<128x128xbf16>, vector<8x128xf32> -> vector<8x128xf32>
    %4 = vector.broadcast %2 : vector<1x128xf32> to vector<8x128xf32>
    %5 = arith.addf %3, %4 : vector<8x128xf32>
    %cst_5 = arith.constant 0.000000e+00 : f32
    %6 = vector.broadcast %cst_5 : f32 to vector<8x128xf32>
    %7 = arith.maximumf %5, %6 : vector<8x128xf32>
    %c0_6 = arith.constant 0 : index
    %c0_7 = arith.constant 0 : index
    %c0_8 = arith.constant 0 : index
    %8 = vector.load %arg4[%c0_6, %c0_7, %c0_8] : memref<2x128x128xbf16, #tpu.memory_space<vmem>>, vector<1x128x128xbf16>
    %9 = vector.shape_cast %8 : vector<1x128x128xbf16> to vector<128x128xbf16>
    %c0_9 = arith.constant 0 : index
    %c0_10 = arith.constant 0 : index
    %c0_11 = arith.constant 0 : index
    %10 = vector.load %arg5[%c0_9, %c0_10, %c0_11] : memref<2x1x128xf32, #tpu.memory_space<vmem>>, vector<1x1x128xf32>
    %11 = vector.shape_cast %10 : vector<1x1x128xf32> to vector<1x128xf32>
    %12 = arith.truncf %7 : vector<8x128xf32> to vector<8x128xbf16>
    %cst_12 = arith.constant dense<0.000000e+00> : vector<8x128xf32>
    %13 = tpu.matmul %12, %9, %cst_12 {dimension_numbers = #tpu.dot_dimension_numbers<[1], [0], [0], [1], [0, 0, 1, 1], [], []>} : vector<8x128xbf16>, vector<128x128xbf16>, vector<8x128xf32> -> vector<8x128xf32>
    %14 = vector.broadcast %11 : vector<1x128xf32> to vector<8x128xf32>
    %15 = arith.addf %13, %14 : vector<8x128xf32>
    %cst_13 = arith.constant 0.000000e+00 : f32
    %16 = vector.broadcast %cst_13 : f32 to vector<8x128xf32>
    %17 = arith.maximumf %15, %16 : vector<8x128xf32>
    %c1 = arith.constant 1 : index
    %c0_14 = arith.constant 0 : index
    %c0_15 = arith.constant 0 : index
    %18 = vector.load %arg4[%c1, %c0_14, %c0_15] : memref<2x128x128xbf16, #tpu.memory_space<vmem>>, vector<1x128x128xbf16>
    %19 = vector.shape_cast %18 : vector<1x128x128xbf16> to vector<128x128xbf16>
    %c1_16 = arith.constant 1 : index
    %c0_17 = arith.constant 0 : index
    %c0_18 = arith.constant 0 : index
    %20 = vector.load %arg5[%c1_16, %c0_17, %c0_18] : memref<2x1x128xf32, #tpu.memory_space<vmem>>, vector<1x1x128xf32>
    %21 = vector.shape_cast %20 : vector<1x1x128xf32> to vector<1x128xf32>
    %22 = arith.truncf %17 : vector<8x128xf32> to vector<8x128xbf16>
    %cst_19 = arith.constant dense<0.000000e+00> : vector<8x128xf32>
    %23 = tpu.matmul %22, %19, %cst_19 {dimension_numbers = #tpu.dot_dimension_numbers<[1], [0], [0], [1], [0, 0, 1, 1], [], []>} : vector<8x128xbf16>, vector<128x128xbf16>, vector<8x128xf32> -> vector<8x128xf32>
    %24 = vector.broadcast %21 : vector<1x128xf32> to vector<8x128xf32>
    %25 = arith.addf %23, %24 : vector<8x128xf32>
    %cst_20 = arith.constant 0.000000e+00 : f32
    %26 = vector.broadcast %cst_20 : f32 to vector<8x128xf32>
    %27 = arith.maximumf %25, %26 : vector<8x128xf32>
    %c0_21 = arith.constant 0 : index
    %c0_22 = arith.constant 0 : index
    %28 = vector.load %arg6[%c0_21, %c0_22] : memref<128x128xbf16, #tpu.memory_space<vmem>>, vector<128x128xbf16>
    %c0_23 = arith.constant 0 : index
    %c0_24 = arith.constant 0 : index
    %29 = vector.load %arg7[%c0_23, %c0_24] : memref<1x128xf32, #tpu.memory_space<vmem>>, vector<1x128xf32>
    %30 = arith.truncf %27 : vector<8x128xf32> to vector<8x128xbf16>
    %cst_25 = arith.constant dense<0.000000e+00> : vector<8x128xf32>
    %31 = tpu.matmul %30, %28, %cst_25 {dimension_numbers = #tpu.dot_dimension_numbers<[1], [0], [0], [1], [0, 0, 1, 1], [], []>} : vector<8x128xbf16>, vector<128x128xbf16>, vector<8x128xf32> -> vector<8x128xf32>
    %32 = vector.broadcast %29 : vector<1x128xf32> to vector<8x128xf32>
    %33 = arith.addf %31, %32 : vector<8x128xf32>
    %cst_26 = arith.constant 0.000000e+00 : f32
    %34 = vector.broadcast %cst_26 : f32 to vector<8x128xf32>
    %35 = arith.maximumf %33, %34 : vector<8x128xf32>
    %c0_27 = arith.constant 0 : index
    %c0_28 = arith.constant 0 : index
    %36 = vector.load %arg8[%c0_27, %c0_28] : memref<128x128xbf16, #tpu.memory_space<vmem>>, vector<128x128xbf16>
    %c0_29 = arith.constant 0 : index
    %c0_30 = arith.constant 0 : index
    %37 = vector.load %arg9[%c0_29, %c0_30] : memref<1x128xf32, #tpu.memory_space<vmem>>, vector<1x128xf32>
    %38 = arith.truncf %35 : vector<8x128xf32> to vector<8x128xbf16>
    %cst_31 = arith.constant dense<0.000000e+00> : vector<8x128xf32>
    %39 = tpu.matmul %38, %36, %cst_31 {dimension_numbers = #tpu.dot_dimension_numbers<[1], [0], [0], [1], [0, 0, 1, 1], [], []>} : vector<8x128xbf16>, vector<128x128xbf16>, vector<8x128xf32> -> vector<8x128xf32>
    %40 = vector.broadcast %37 : vector<1x128xf32> to vector<8x128xf32>
    %41 = arith.addf %39, %40 : vector<8x128xf32>
    %cst_32 = arith.constant 0.000000e+00 : f32
    %42 = vector.broadcast %cst_32 : f32 to vector<8x128xf32>
    %43 = arith.maximumf %41, %42 : vector<8x128xf32>
    %c0_33 = arith.constant 0 : index
    %c0_34 = arith.constant 0 : index
    %44 = vector.load %arg13[%c0_33, %c0_34] : memref<8x128xf32, #tpu.memory_space<vmem>>, vector<8x128xf32>
    tpu.vector_store %arg13[%c0_33, %c0_34], %43 {strides = array<i32>} : memref<8x128xf32, #tpu.memory_space<vmem>>, vector<8x128xf32>,
    %c0_35 = arith.constant 0 : index
    %c0_36 = arith.constant 0 : index
    %45 = vector.load %arg10[%c0_35, %c0_36] : memref<128x128xbf16, #tpu.memory_space<vmem>>, vector<128x128xbf16>
    %c0_37 = arith.constant 0 : index
    %c0_38 = arith.constant 0 : index
    %46 = vector.load %arg11[%c0_37, %c0_38] : memref<1x128xf32, #tpu.memory_space<vmem>>, vector<1x128xf32>
    %47 = arith.truncf %43 : vector<8x128xf32> to vector<8x128xbf16>
    %cst_39 = arith.constant dense<0.000000e+00> : vector<8x128xf32>
    %48 = tpu.matmul %47, %45, %cst_39 {dimension_numbers = #tpu.dot_dimension_numbers<[1], [0], [0], [1], [0, 0, 1, 1], [], []>} : vector<8x128xbf16>, vector<128x128xbf16>, vector<8x128xf32> -> vector<8x128xf32>
    %49 = vector.broadcast %46 : vector<1x128xf32> to vector<8x128xf32>
    %50 = arith.addf %48, %49 : vector<8x128xf32>
    %c0_40 = arith.constant 0 : index
    %c0_41 = arith.constant 0 : index
    %51 = vector.load %arg12[%c0_40, %c0_41] : memref<8x128xf32, #tpu.memory_space<vmem>>, vector<8x128xf32>
    tpu.vector_store %arg12[%c0_40, %c0_41], %50 {strides = array<i32>} : memref<8x128xf32, #tpu.memory_space<vmem>>, vector<8x128xf32>,
    return
  }
  func.func @transform_0(%arg0: i32) -> (i32, i32) {
    %c0_i32 = arith.constant 0 : i32
    %c0_i32_0 = arith.constant 0 : i32
    return %arg0, %c0_i32 : i32, i32
  }
  func.func @transform_1(%arg0: i32) -> (i32, i32) {
    %c0_i32 = arith.constant 0 : i32
    %c0_i32_0 = arith.constant 0 : i32
    %c0_i32_1 = arith.constant 0 : i32
    return %c0_i32, %c0_i32_0 : i32, i32
  }
  func.func @transform_2(%arg0: i32) -> (i32, i32) {
    %c0_i32 = arith.constant 0 : i32
    %c0_i32_0 = arith.constant 0 : i32
    %c0_i32_1 = arith.constant 0 : i32
    return %c0_i32, %c0_i32_0 : i32, i32
  }
  func.func @transform_3(%arg0: i32) -> (i32, i32, i32) {
    %c0_i32 = arith.constant 0 : i32
    %c0_i32_0 = arith.constant 0 : i32
    %c0_i32_1 = arith.constant 0 : i32
    %c0_i32_2 = arith.constant 0 : i32
    return %c0_i32, %c0_i32_0, %c0_i32_1 : i32, i32, i32
  }
  func.func @transform_4(%arg0: i32) -> (i32, i32, i32) {
    %c0_i32 = arith.constant 0 : i32
    %c0_i32_0 = arith.constant 0 : i32
    %c0_i32_1 = arith.constant 0 : i32
    %c0_i32_2 = arith.constant 0 : i32
    return %c0_i32, %c0_i32_0, %c0_i32_1 : i32, i32, i32
  }
  func.func @transform_5(%arg0: i32) -> (i32, i32) {
    %c0_i32 = arith.constant 0 : i32
    %c0_i32_0 = arith.constant 0 : i32
    %c0_i32_1 = arith.constant 0 : i32
    return %c0_i32, %c0_i32_0 : i32, i32
  }
  func.func @transform_6(%arg0: i32) -> (i32, i32) {
    %c0_i32 = arith.constant 0 : i32
    %c0_i32_0 = arith.constant 0 : i32
    %c0_i32_1 = arith.constant 0 : i32
    return %c0_i32, %c0_i32_0 : i32, i32
  }
  func.func @transform_7(%arg0: i32) -> (i32, i32) {
    %c0_i32 = arith.constant 0 : i32
    %c0_i32_0 = arith.constant 0 : i32
    %c0_i32_1 = arith.constant 0 : i32
    return %c0_i32, %c0_i32_0 : i32, i32
  }
  func.func @transform_8(%arg0: i32) -> (i32, i32) {
    %c0_i32 = arith.constant 0 : i32
    %c0_i32_0 = arith.constant 0 : i32
    %c0_i32_1 = arith.constant 0 : i32
    return %c0_i32, %c0_i32_0 : i32, i32
  }
  func.func @transform_9(%arg0: i32) -> (i32, i32) {
    %c0_i32 = arith.constant 0 : i32
    %c0_i32_0 = arith.constant 0 : i32
    %c0_i32_1 = arith.constant 0 : i32
    return %c0_i32, %c0_i32_0 : i32, i32
  }
  func.func @transform_10(%arg0: i32) -> (i32, i32) {
    %c0_i32 = arith.constant 0 : i32
    %c0_i32_0 = arith.constant 0 : i32
    %c0_i32_1 = arith.constant 0 : i32
    return %c0_i32, %c0_i32_0 : i32, i32
  }
  func.func @transform_11(%arg0: i32) -> (i32, i32) {
    %c0_i32 = arith.constant 0 : i32
    %c0_i32_0 = arith.constant 0 : i32
    return %arg0, %c0_i32 : i32, i32
  }
  func.func @transform_12(%arg0: i32) -> (i32, i32) {
    %c0_i32 = arith.constant 0 : i32
    %c0_i32_0 = arith.constant 0 : i32
    return %arg0, %c0_i32 : i32, i32
  }
}

</mosaic_0001>

<llo_original>
// kernel: mlp_forward.1
$region0: #{mlp_forward.1}
  #allocation0 [shape = 'u32[]', space=smem, size = 0x4, offset = 0x4, fixed_abs, tag = 'smem constant byte address 0x4 - core index']
  #allocation1 [shape = 'u32[144,128]{1,0:T(1,128)}', space=vmem, size = 0x12000, scoped, tag = 'internal scratch']
  %s0 = inlined_call_operand.vmem [shape: bf16[8,128], index: 0, kind: input, shape index: {}]
  %s1 = inlined_call_operand.hbm [shape: bf16[128,128], index: 1, kind: input, shape index: {}]
  %s2 = inlined_call_operand.vmem [shape: f32[1,128], index: 2, kind: input, shape index: {}]
  %s3 = inlined_call_operand.vmem [shape: bf16[2,128,128], index: 3, kind: input, shape index: {}]
  %s4 = inlined_call_operand.vmem [shape: f32[2,1,128], index: 4, kind: input, shape index: {}]
  %s5 = inlined_call_operand.hbm [shape: bf16[128,128], index: 5, kind: input, shape index: {}]
  %s6 = inlined_call_operand.vmem [shape: f32[1,128], index: 6, kind: input, shape index: {}]
  %s7 = inlined_call_operand.hbm [shape: bf16[128,128], index: 7, kind: input, shape index: {}]
  %s8 = inlined_call_operand.vmem [shape: f32[1,128], index: 8, kind: input, shape index: {}]
  %s9 = inlined_call_operand.hbm [shape: bf16[128,128], index: 9, kind: input, shape index: {}]
  %s10 = inlined_call_operand.vmem [shape: f32[1,128], index: 10, kind: input, shape index: {}]
  %s11 = inlined_call_operand.vmem [shape: f32[8,128], index: 11, kind: output, shape index: {0}]
  %s12 = inlined_call_operand.vmem [shape: f32[8,128], index: 12, kind: output, shape index: {1}]
  %13 = xla_tuple %s11, %s12
  %s14 = sld [smem:[#allocation0]]
  $region78: #{mlp_forward.1} parent=0
    _
  %s16 = ssub.s32 1, %s14
  %s17 = scalar_select 0, %s16, %s14
  $region1: #{mlp_forward.1} parent=0
    #allocation2 [shape = 'u8[32768]{0}', space=vmem, size = 0x8000, scoped, tag = 'input window, operand 1, single buffered']
    #allocation3 [shape = 's32[1]{0}', space=sflag, size = 0x4, scoped, tag = 'scoped memory for mlp_forward.1']
    #allocation4 [shape = 'u8[32768]{0}', space=vmem, size = 0x8000, scoped, tag = 'input window, operand 5, single buffered']
    #allocation5 [shape = 's32[1]{0}', space=sflag, size = 0x4, scoped, tag = 'scoped memory for mlp_forward.1']
    #allocation6 [shape = 'u8[32768]{0}', space=vmem, size = 0x8000, scoped, tag = 'input window, operand 7, single buffered']
    #allocation7 [shape = 'u8[32768]{0}', space=vmem, size = 0x8000, scoped, tag = 'input window, operand 9, single buffered']
    #allocation8 [shape = 's32[1]{0}', space=sflag, size = 0x4, scoped, tag = 'scoped memory for mlp_forward.1']
    %18 = vsyncpa [#allocation3], 0
    %19 = vsyncpa [#allocation5], 0
    %20 = vsyncpa [#allocation8], 0
    // Predicated region
    $region2: #{mlp_forward.1} parent=1 // pred_check
      _
    $region3: #{mlp_forward.1} parent=1 // pred_check_branch
      %22 = sbr.rel (0) target = $region5
    $region4: #{mlp_forward.1} parent=1 // pred_region
      _
    $region5: #{mlp_forward.1} parent=1 // pred_fallthru
      _
    // Predicated region
    $region6: #{mlp_forward.1} parent=1 // pred_check
      _
    $region7: #{mlp_forward.1} parent=1 // pred_check_branch
      %24 = sbr.rel (0) target = $region9
    $region8: #{mlp_forward.1} parent=1 // pred_region
      %s26 = ssub.s32 1024, 1024
      %27 = vsyncadd [#allocation3], %s26
      %s28 = sshll.u32 [#allocation2], 4
      %s29 = int_to_ptr.vmem [resolvable:$true] %s28
      %34 = dma.hbm_to_vmem [thread:$0]  %s1, 1024, %s29, [#allocation3], 64, 64, 4
    $region9: #{mlp_forward.1} parent=1 // pred_fallthru
      _
    // Predicated region
    $region10: #{mlp_forward.1} parent=1 // pred_check
      _
    $region11: #{mlp_forward.1} parent=1 // pred_check_branch
      %36 = sbr.rel (0) target = $region13
    $region12: #{mlp_forward.1} parent=1 // pred_region
      _
    $region13: #{mlp_forward.1} parent=1 // pred_fallthru
      _
    // Predicated region
    $region14: #{mlp_forward.1} parent=1 // pred_check
      _
    $region15: #{mlp_forward.1} parent=1 // pred_check_branch
      %38 = sbr.rel (0) target = $region17
    $region16: #{mlp_forward.1} parent=1 // pred_region
      _
    $region17: #{mlp_forward.1} parent=1 // pred_fallthru
      _
    // Predicated region
    $region18: #{mlp_forward.1} parent=1 // pred_check
      _
    $region19: #{mlp_forward.1} parent=1 // pred_check_branch
      %40 = sbr.rel (0) target = $region21
    $region20: #{mlp_forward.1} parent=1 // pred_region
      _
    $region21: #{mlp_forward.1} parent=1 // pred_fallthru
      _
    // Predicated region
    $region22: #{mlp_forward.1} parent=1 // pred_check
      _
    $region23: #{mlp_forward.1} parent=1 // pred_check_branch
      %42 = sbr.rel (0) target = $region25
    $region24: #{mlp_forward.1} parent=1 // pred_region
      %s44 = ssub.s32 1024, 1024
      %45 = vsyncadd [#allocation5], %s44
      %s46 = sshll.u32 [#allocation4], 4
      %s47 = int_to_ptr.vmem [resolvable:$true] %s46
      %52 = dma.hbm_to_vmem [thread:$0]  %s5, 1024, %s47, [#allocation5], 64, 64, 4
    $region25: #{mlp_forward.1} parent=1 // pred_fallthru
      _
    // Predicated region
    $region26: #{mlp_forward.1} parent=1 // pred_check
      _
    $region27: #{mlp_forward.1} parent=1 // pred_check_branch
      %54 = sbr.rel (0) target = $region29
    $region28: #{mlp_forward.1} parent=1 // pred_region
      _
    $region29: #{mlp_forward.1} parent=1 // pred_fallthru
      _
    // Predicated region
    $region30: #{mlp_forward.1} parent=1 // pred_check
      _
    $region31: #{mlp_forward.1} parent=1 // pred_check_branch
      %56 = sbr.rel (0) target = $region33
    $region32: #{mlp_forward.1} parent=1 // pred_region
      %s58 = ssub.s32 1024, 1024
      %59 = vsyncadd [#allocation5], %s58
      %s60 = sshll.u32 [#allocation6], 4
      %s61 = int_to_ptr.vmem [resolvable:$true] %s60
      %66 = dma.hbm_to_vmem [thread:$0]  %s7, 1024, %s61, [#allocation5], 64, 64, 4
    $region33: #{mlp_forward.1} parent=1 // pred_fallthru
      _
    // Predicated region
    $region34: #{mlp_forward.1} parent=1 // pred_check
      _
    $region35: #{mlp_forward.1} parent=1 // pred_check_branch
      %68 = sbr.rel (0) target = $region37
    $region36: #{mlp_forward.1} parent=1 // pred_region
      _
    $region37: #{mlp_forward.1} parent=1 // pred_fallthru
      _
    // Predicated region
    $region38: #{mlp_forward.1} parent=1 // pred_check
      _
    $region39: #{mlp_forward.1} parent=1 // pred_check_branch
      %70 = sbr.rel (0) target = $region41
    $region40: #{mlp_forward.1} parent=1 // pred_region
      %s72 = ssub.s32 1024, 1024
      %73 = vsyncadd [#allocation8], %s72
      %s74 = sshll.u32 [#allocation7], 4
      %s75 = int_to_ptr.vmem [resolvable:$true] %s74
      %80 = dma.hbm_to_vmem [thread:$0]  %s9, 1024, %s75, [#allocation8], 64, 64, 4
    $region41: #{mlp_forward.1} parent=1 // pred_fallthru
      _
    // Predicated region
    $region42: #{mlp_forward.1} parent=1 // pred_check
      _
    $region43: #{mlp_forward.1} parent=1 // pred_check_branch
      %82 = sbr.rel (0) target = $region45
    $region44: #{mlp_forward.1} parent=1 // pred_region
      _
    $region45: #{mlp_forward.1} parent=1 // pred_fallthru
      _
    // Predicated region
    $region46: #{mlp_forward.1} parent=1 // pred_check
      _
    $region47: #{mlp_forward.1} parent=1 // pred_check_branch
      %84 = sbr.rel (0) target = $region49
    $region48: #{mlp_forward.1} parent=1 // pred_region
      %85 = dma.done [#allocation3], 1024
    $region49: #{mlp_forward.1} parent=1 // pred_fallthru
      _
    // Predicated region
    $region50: #{mlp_forward.1} parent=1 // pred_check
      _
    $region51: #{mlp_forward.1} parent=1 // pred_check_branch
      %87 = sbr.rel (0) target = $region53
    $region52: #{mlp_forward.1} parent=1 // pred_region
      %88 = dma.done [#allocation5], 1024
    $region53: #{mlp_forward.1} parent=1 // pred_fallthru
      _
    // Predicated region
    $region54: #{mlp_forward.1} parent=1 // pred_check
      _
    $region55: #{mlp_forward.1} parent=1 // pred_check_branch
      %90 = sbr.rel (0) target = $region57
    $region56: #{mlp_forward.1} parent=1 // pred_region
      %91 = dma.done [#allocation5], 1024
    $region57: #{mlp_forward.1} parent=1 // pred_fallthru
      _
    // Predicated region
    $region58: #{mlp_forward.1} parent=1 // pred_check
      _
    $region59: #{mlp_forward.1} parent=1 // pred_check_branch
      %93 = sbr.rel (0) target = $region61
    $region60: #{mlp_forward.1} parent=1 // pred_region
      %94 = dma.done [#allocation8], 1024
    $region61: #{mlp_forward.1} parent=1 // pred_fallthru
      _
    %v96 = vld [vmem:[%s0] sm:$0xf]
    %v97 = vld [vmem:[#allocation2] sm:$0xf]
    %v98 = vld [vmem:[#allocation2 + $0x4] sm:$0xf]
    %v99 = vld [vmem:[#allocation2 + $0x8] sm:$0xf]
    %v100 = vld [vmem:[#allocation2 + $0xc] sm:$0xf]
    %v101 = vld [vmem:[#allocation2 + $0x10] sm:$0xf]
    %v102 = vld [vmem:[#allocation2 + $0x14] sm:$0xf]
    %v103 = vld [vmem:[#allocation2 + $0x18] sm:$0xf]
    %v104 = vld [vmem:[#allocation2 + $0x1c] sm:$0xf]
    %v105 = vld [vmem:[#allocation2 + $0x20] sm:$0xf]
    %v106 = vld [vmem:[#allocation2 + $0x24] sm:$0xf]
    %v107 = vld [vmem:[#allocation2 + $0x28] sm:$0xf]
    %v108 = vld [vmem:[#allocation2 + $0x2c] sm:$0xf]
    %v109 = vld [vmem:[#allocation2 + $0x30] sm:$0xf]
    %v110 = vld [vmem:[#allocation2 + $0x34] sm:$0xf]
    %v111 = vld [vmem:[#allocation2 + $0x38] sm:$0xf]
    %v112 = vld [vmem:[#allocation2 + $0x3c] sm:$0xf]
    %v113 = vld [vmem:[%s2] sm:$0x1]
    %v115 = vlaneseq
    %v116 = vshrl.u32 %v115, 7
    %v117 = vsub.s32 0, %v116
    %v118 = vrot.slane %v113, %v117
    %v136 = vunpack.c.l.b16 %v97
    %v137 = vunpack.c.l.b16 %v98
    %v138 = vunpack.c.l.b16 %v99
    %v139 = vunpack.c.l.b16 %v100
    %v140 = vunpack.c.l.b16 %v101
    %v141 = vunpack.c.l.b16 %v102
    %v142 = vunpack.c.l.b16 %v103
    %v143 = vunpack.c.l.b16 %v104
    %v144 = vunpack.c.l.b16 %v105
    %v145 = vunpack.c.l.b16 %v106
    %v146 = vunpack.c.l.b16 %v107
    %v147 = vunpack.c.l.b16 %v108
    %v148 = vunpack.c.l.b16 %v109
    %v149 = vunpack.c.l.b16 %v110
    %v150 = vunpack.c.l.b16 %v111
    %v151 = vunpack.c.l.b16 %v112
    %v152 = vpack.c.b16 %v137, %v136
    %v153 = vpack.c.b16 %v139, %v138
    %v154 = vpack.c.b16 %v141, %v140
    %v155 = vpack.c.b16 %v143, %v142
    %v156 = vpack.c.b16 %v145, %v144
    %v157 = vpack.c.b16 %v147, %v146
    %v158 = vpack.c.b16 %v149, %v148
    %v159 = vpack.c.b16 %v151, %v150
    %168 = vmatprep.subr.bf16.mxu0 0
    %169 = vmatpush1.bf16.msra.mxu0 %v152
    %170 = vmatprep.subr.bf16.mxu0 0
    %171 = vmatpush1.bf16.msra.mxu0 %v153
    %172 = vmatprep.subr.bf16.mxu0 0
    %173 = vmatpush1.bf16.msra.mxu0 %v154
    %174 = vmatprep.subr.bf16.mxu0 0
    %175 = vmatpush1.bf16.msra.mxu0 %v155
    %176 = vmatprep.subr.bf16.mxu0 0
    %177 = vmatpush1.bf16.msra.mxu0 %v156
    %178 = vmatprep.subr.bf16.mxu0 0
    %179 = vmatpush1.bf16.msra.mxu0 %v157
    %180 = vmatprep.subr.bf16.mxu0 0
    %181 = vmatpush1.bf16.msra.mxu0 %v158
    %182 = vmatprep.subr.bf16.mxu0 0
    %183 = vmatpush1.bf16.msra.mxu0 %v159
    %184 = vmatprep.subr.bf16.mxu0 0
    %185 = vmatpush1.bf16.msra.mxu0 0
    %186 = vmatprep.subr.bf16.mxu0 0
    %187 = vmatpush1.bf16.msra.mxu0 0
    %188 = vmatprep.subr.bf16.mxu0 0
    %189 = vmatpush1.bf16.msra.mxu0 0
    %190 = vmatprep.subr.bf16.mxu0 0
    %191 = vmatpush1.bf16.msra.mxu0 0
    %192 = vmatprep.subr.bf16.mxu0 0
    %193 = vmatpush1.bf16.msra.mxu0 0
    %194 = vmatprep.subr.bf16.mxu0 0
    %195 = vmatpush1.bf16.msra.mxu0 0
    %196 = vmatprep.subr.bf16.mxu0 0
    %197 = vmatpush1.bf16.msra.mxu0 0
    %198 = vmatprep.subr.bf16.mxu0 0
    %199 = vmatpush1.bf16.msra.mxu0 0
    %200 = vmatprep.mubr.bf16.mxu0 0
    %201 = vmatmul.mubr.bf16.gmra.mrb[0].mxu0 %v96
    %v202 = vpop.f32.mrb[0].mxu0
    %v203 = vadd.f32 %v118, %v202
    %v204 = vpop.f32.mrb[0].mxu0
    %v205 = vpop.f32.mrb[0].mxu0
    %v206 = vpop.f32.mrb[0].mxu0
    %207 = vdwg.mxu0
    %v208 = vmax.f32 %v203, 0.0
    %v209 = vld [vmem:[%s3] sm:$0xf]
    %v210 = vld [vmem:[%s3 + $0x4] sm:$0xf]
    %v211 = vld [vmem:[%s3 + $0x8] sm:$0xf]
    %v212 = vld [vmem:[%s3 + $0xc] sm:$0xf]
    %v213 = vld [vmem:[%s3 + $0x10] sm:$0xf]
    %v214 = vld [vmem:[%s3 + $0x14] sm:$0xf]
    %v215 = vld [vmem:[%s3 + $0x18] sm:$0xf]
    %v216 = vld [vmem:[%s3 + $0x1c] sm:$0xf]
    %v217 = vld [vmem:[%s3 + $0x20] sm:$0xf]
    %v218 = vld [vmem:[%s3 + $0x24] sm:$0xf]
    %v219 = vld [vmem:[%s3 + $0x28] sm:$0xf]
    %v220 = vld [vmem:[%s3 + $0x2c] sm:$0xf]
    %v221 = vld [vmem:[%s3 + $0x30] sm:$0xf]
    %v222 = vld [vmem:[%s3 + $0x34] sm:$0xf]
    %v223 = vld [vmem:[%s3 + $0x38] sm:$0xf]
    %v224 = vld [vmem:[%s3 + $0x3c] sm:$0xf]
    %v225 = vld [vmem:[%s4] sm:$0x1]
    %v226 = vpack.c.bf16 %v208, %v208
    %v228 = vlaneseq
    %v229 = vshrl.u32 %v228, 7
    %v230 = vsub.s32 0, %v229
    %v231 = vrot.slane %v225, %v230
    %v249 = vunpack.c.l.b16 %v209
    %v250 = vunpack.c.l.b16 %v210
    %v251 = vunpack.c.l.b16 %v211
    %v252 = vunpack.c.l.b16 %v212
    %v253 = vunpack.c.l.b16 %v213
    %v254 = vunpack.c.l.b16 %v214
    %v255 = vunpack.c.l.b16 %v215
    %v256 = vunpack.c.l.b16 %v216
    %v257 = vunpack.c.l.b16 %v217
    %v258 = vunpack.c.l.b16 %v218
    %v259 = vunpack.c.l.b16 %v219
    %v260 = vunpack.c.l.b16 %v220
    %v261 = vunpack.c.l.b16 %v221
    %v262 = vunpack.c.l.b16 %v222
    %v263 = vunpack.c.l.b16 %v223
    %v264 = vunpack.c.l.b16 %v224
    %v265 = vpack.c.b16 %v250, %v249
    %v266 = vpack.c.b16 %v252, %v251
    %v267 = vpack.c.b16 %v254, %v253
    %v268 = vpack.c.b16 %v256, %v255
    %v269 = vpack.c.b16 %v258, %v257
    %v270 = vpack.c.b16 %v260, %v259
    %v271 = vpack.c.b16 %v262, %v261
    %v272 = vpack.c.b16 %v264, %v263
    %281 = vmatprep.subr.bf16.mxu0 0
    %282 = vmatpush1.bf16.msra.mxu0 %v265
    %283 = vmatprep.subr.bf16.mxu0 0
    %284 = vmatpush1.bf16.msra.mxu0 %v266
    %285 = vmatprep.subr.bf16.mxu0 0
    %286 = vmatpush1.bf16.msra.mxu0 %v267
    %287 = vmatprep.subr.bf16.mxu0 0
    %288 = vmatpush1.bf16.msra.mxu0 %v268
    %289 = vmatprep.subr.bf16.mxu0 0
    %290 = vmatpush1.bf16.msra.mxu0 %v269
    %291 = vmatprep.subr.bf16.mxu0 0
    %292 = vmatpush1.bf16.msra.mxu0 %v270
    %293 = vmatprep.subr.bf16.mxu0 0
    %294 = vmatpush1.bf16.msra.mxu0 %v271
    %295 = vmatprep.subr.bf16.mxu0 0
    %296 = vmatpush1.bf16.msra.mxu0 %v272
    %297 = vmatprep.subr.bf16.mxu0 0
    %298 = vmatpush1.bf16.msra.mxu0 0
    %299 = vmatprep.subr.bf16.mxu0 0
    %300 = vmatpush1.bf16.msra.mxu0 0
    %301 = vmatprep.subr.bf16.mxu0 0
    %302 = vmatpush1.bf16.msra.mxu0 0
    %303 = vmatprep.subr.bf16.mxu0 0
    %304 = vmatpush1.bf16.msra.mxu0 0
    %305 = vmatprep.subr.bf16.mxu0 0
    %306 = vmatpush1.bf16.msra.mxu0 0
    %307 = vmatprep.subr.bf16.mxu0 0
    %308 = vmatpush1.bf16.msra.mxu0 0
    %309 = vmatprep.subr.bf16.mxu0 0
    %310 = vmatpush1.bf16.msra.mxu0 0
    %311 = vmatprep.subr.bf16.mxu0 0
    %312 = vmatpush1.bf16.msra.mxu0 0
    %313 = vmatprep.mubr.bf16.mxu0 0
    %314 = vmatmul.mubr.bf16.gmra.mrb[0].mxu0 %v226
    %v315 = vpop.f32.mrb[0].mxu0
    %v316 = vadd.f32 %v231, %v315
    %v317 = vpop.f32.mrb[0].mxu0
    %v318 = vpop.f32.mrb[0].mxu0
    %v319 = vpop.f32.mrb[0].mxu0
    %320 = vdwg.mxu0
    %v321 = vmax.f32 %v316, 0.0
    %s322 = scalar_lea.vmem %s3, 64
    %v323 = vld [vmem:[%s322] sm:$0xf]
    %v324 = vld [vmem:[%s322 + $0x4] sm:$0xf]
    %v325 = vld [vmem:[%s322 + $0x8] sm:$0xf]
    %v326 = vld [vmem:[%s322 + $0xc] sm:$0xf]
    %v327 = vld [vmem:[%s322 + $0x10] sm:$0xf]
    %v328 = vld [vmem:[%s322 + $0x14] sm:$0xf]
    %v329 = vld [vmem:[%s322 + $0x18] sm:$0xf]
    %v330 = vld [vmem:[%s322 + $0x1c] sm:$0xf]
    %v331 = vld [vmem:[%s322 + $0x20] sm:$0xf]
    %v332 = vld [vmem:[%s322 + $0x24] sm:$0xf]
    %v333 = vld [vmem:[%s322 + $0x28] sm:$0xf]
    %v334 = vld [vmem:[%s322 + $0x2c] sm:$0xf]
    %v335 = vld [vmem:[%s322 + $0x30] sm:$0xf]
    %v336 = vld [vmem:[%s322 + $0x34] sm:$0xf]
    %v337 = vld [vmem:[%s322 + $0x38] sm:$0xf]
    %v338 = vld [vmem:[%s322 + $0x3c] sm:$0xf]
    %s339 = scalar_lea.vmem %s4, 1
    %v340 = vld [vmem:[%s339] sm:$0x1]
    %v341 = vpack.c.bf16 %v321, %v321
    %v343 = vlaneseq
    %v344 = vshrl.u32 %v343, 7
    %v345 = vsub.s32 0, %v344
    %v346 = vrot.slane %v340, %v345
    %v364 = vunpack.c.l.b16 %v323
    %v365 = vunpack.c.l.b16 %v324
    %v366 = vunpack.c.l.b16 %v325
    %v367 = vunpack.c.l.b16 %v326
    %v368 = vunpack.c.l.b16 %v327
    %v369 = vunpack.c.l.b16 %v328
    %v370 = vunpack.c.l.b16 %v329
    %v371 = vunpack.c.l.b16 %v330
    %v372 = vunpack.c.l.b16 %v331
    %v373 = vunpack.c.l.b16 %v332
    %v374 = vunpack.c.l.b16 %v333
    %v375 = vunpack.c.l.b16 %v334
    %v376 = vunpack.c.l.b16 %v335
    %v377 = vunpack.c.l.b16 %v336
    %v378 = vunpack.c.l.b16 %v337
    %v379 = vunpack.c.l.b16 %v338
    %v380 = vpack.c.b16 %v365, %v364
    %v381 = vpack.c.b16 %v367, %v366
    %v382 = vpack.c.b16 %v369, %v368
    %v383 = vpack.c.b16 %v371, %v370
    %v384 = vpack.c.b16 %v373, %v372
    %v385 = vpack.c.b16 %v375, %v374
    %v386 = vpack.c.b16 %v377, %v376
    %v387 = vpack.c.b16 %v379, %v378
    %396 = vmatprep.subr.bf16.mxu0 0
    %397 = vmatpush1.bf16.msra.mxu0 %v380
    %398 = vmatprep.subr.bf16.mxu0 0
    %399 = vmatpush1.bf16.msra.mxu0 %v381
    %400 = vmatprep.subr.bf16.mxu0 0
    %401 = vmatpush1.bf16.msra.mxu0 %v382
    %402 = vmatprep.subr.bf16.mxu0 0
    %403 = vmatpush1.bf16.msra.mxu0 %v383
    %404 = vmatprep.subr.bf16.mxu0 0
    %405 = vmatpush1.bf16.msra.mxu0 %v384
    %406 = vmatprep.subr.bf16.mxu0 0
    %407 = vmatpush1.bf16.msra.mxu0 %v385
    %408 = vmatprep.subr.bf16.mxu0 0
    %409 = vmatpush1.bf16.msra.mxu0 %v386
    %410 = vmatprep.subr.bf16.mxu0 0
    %411 = vmatpush1.bf16.msra.mxu0 %v387
    %412 = vmatprep.subr.bf16.mxu0 0
    %413 = vmatpush1.bf16.msra.mxu0 0
    %414 = vmatprep.subr.bf16.mxu0 0
    %415 = vmatpush1.bf16.msra.mxu0 0
    %416 = vmatprep.subr.bf16.mxu0 0
    %417 = vmatpush1.bf16.msra.mxu0 0
    %418 = vmatprep.subr.bf16.mxu0 0
    %419 = vmatpush1.bf16.msra.mxu0 0
    %420 = vmatprep.subr.bf16.mxu0 0
    %421 = vmatpush1.bf16.msra.mxu0 0
    %422 = vmatprep.subr.bf16.mxu0 0
    %423 = vmatpush1.bf16.msra.mxu0 0
    %424 = vmatprep.subr.bf16.mxu0 0
    %425 = vmatpush1.bf16.msra.mxu0 0
    %426 = vmatprep.subr.bf16.mxu0 0
    %427 = vmatpush1.bf16.msra.mxu0 0
    %428 = vmatprep.mubr.bf16.mxu0 0
    %429 = vmatmul.mubr.bf16.gmra.mrb[0].mxu0 %v341
    %v430 = vpop.f32.mrb[0].mxu0
    %v431 = vadd.f32 %v346, %v430
    %v432 = vpop.f32.mrb[0].mxu0
    %v433 = vpop.f32.mrb[0].mxu0
    %v434 = vpop.f32.mrb[0].mxu0
    %435 = vdwg.mxu0
    %v436 = vmax.f32 %v431, 0.0
    %v437 = vld [vmem:[#allocation4] sm:$0xf]
    %v438 = vld [vmem:[#allocation4 + $0x4] sm:$0xf]
    %v439 = vld [vmem:[#allocation4 + $0x8] sm:$0xf]
    %v440 = vld [vmem:[#allocation4 + $0xc] sm:$0xf]
    %v441 = vld [vmem:[#allocation4 + $0x10] sm:$0xf]
    %v442 = vld [vmem:[#allocation4 + $0x14] sm:$0xf]
    %v443 = vld [vmem:[#allocation4 + $0x18] sm:$0xf]
    %v444 = vld [vmem:[#allocation4 + $0x1c] sm:$0xf]
    %v445 = vld [vmem:[#allocation4 + $0x20] sm:$0xf]
    %v446 = vld [vmem:[#allocation4 + $0x24] sm:$0xf]
    %v447 = vld [vmem:[#allocation4 + $0x28] sm:$0xf]
    %v448 = vld [vmem:[#allocation4 + $0x2c] sm:$0xf]
    %v449 = vld [vmem:[#allocation4 + $0x30] sm:$0xf]
    %v450 = vld [vmem:[#allocation4 + $0x34] sm:$0xf]
    %v451 = vld [vmem:[#allocation4 + $0x38] sm:$0xf]
    %v452 = vld [vmem:[#allocation4 + $0x3c] sm:$0xf]
    %v453 = vld [vmem:[%s6] sm:$0x1]
    %v454 = vpack.c.bf16 %v436, %v436
    %v456 = vlaneseq
    %v457 = vshrl.u32 %v456, 7
    %v458 = vsub.s32 0, %v457
    %v459 = vrot.slane %v453, %v458
    %v477 = vunpack.c.l.b16 %v437
    %v478 = vunpack.c.l.b16 %v438
    %v479 = vunpack.c.l.b16 %v439
    %v480 = vunpack.c.l.b16 %v440
    %v481 = vunpack.c.l.b16 %v441
    %v482 = vunpack.c.l.b16 %v442
    %v483 = vunpack.c.l.b16 %v443
    %v484 = vunpack.c.l.b16 %v444
    %v485 = vunpack.c.l.b16 %v445
    %v486 = vunpack.c.l.b16 %v446
    %v487 = vunpack.c.l.b16 %v447
    %v488 = vunpack.c.l.b16 %v448
    %v489 = vunpack.c.l.b16 %v449
    %v490 = vunpack.c.l.b16 %v450
    %v491 = vunpack.c.l.b16 %v451
    %v492 = vunpack.c.l.b16 %v452
    %v493 = vpack.c.b16 %v478, %v477
    %v494 = vpack.c.b16 %v480, %v479
    %v495 = vpack.c.b16 %v482, %v481
    %v496 = vpack.c.b16 %v484, %v483
    %v497 = vpack.c.b16 %v486, %v485
    %v498 = vpack.c.b16 %v488, %v487
    %v499 = vpack.c.b16 %v490, %v489
    %v500 = vpack.c.b16 %v492, %v491
    %509 = vmatprep.subr.bf16.mxu0 0
    %510 = vmatpush1.bf16.msra.mxu0 %v493
    %511 = vmatprep.subr.bf16.mxu0 0
    %512 = vmatpush1.bf16.msra.mxu0 %v494
    %513 = vmatprep.subr.bf16.mxu0 0
    %514 = vmatpush1.bf16.msra.mxu0 %v495
    %515 = vmatprep.subr.bf16.mxu0 0
    %516 = vmatpush1.bf16.msra.mxu0 %v496
    %517 = vmatprep.subr.bf16.mxu0 0
    %518 = vmatpush1.bf16.msra.mxu0 %v497
    %519 = vmatprep.subr.bf16.mxu0 0
    %520 = vmatpush1.bf16.msra.mxu0 %v498
    %521 = vmatprep.subr.bf16.mxu0 0
    %522 = vmatpush1.bf16.msra.mxu0 %v499
    %523 = vmatprep.subr.bf16.mxu0 0
    %524 = vmatpush1.bf16.msra.mxu0 %v500
    %525 = vmatprep.subr.bf16.mxu0 0
    %526 = vmatpush1.bf16.msra.mxu0 0
    %527 = vmatprep.subr.bf16.mxu0 0
    %528 = vmatpush1.bf16.msra.mxu0 0
    %529 = vmatprep.subr.bf16.mxu0 0
    %530 = vmatpush1.bf16.msra.mxu0 0
    %531 = vmatprep.subr.bf16.mxu0 0
    %532 = vmatpush1.bf16.msra.mxu0 0
    %533 = vmatprep.subr.bf16.mxu0 0
    %534 = vmatpush1.bf16.msra.mxu0 0
    %535 = vmatprep.subr.bf16.mxu0 0
    %536 = vmatpush1.bf16.msra.mxu0 0
    %537 = vmatprep.subr.bf16.mxu0 0
    %538 = vmatpush1.bf16.msra.mxu0 0
    %539 = vmatprep.subr.bf16.mxu0 0
    %540 = vmatpush1.bf16.msra.mxu0 0
    %541 = vmatprep.mubr.bf16.mxu0 0
    %542 = vmatmul.mubr.bf16.gmra.mrb[0].mxu0 %v454
    %v543 = vpop.f32.mrb[0].mxu0
    %v544 = vadd.f32 %v459, %v543
    %v545 = vpop.f32.mrb[0].mxu0
    %v546 = vpop.f32.mrb[0].mxu0
    %v547 = vpop.f32.mrb[0].mxu0
    %548 = vdwg.mxu0
    %v549 = vmax.f32 %v544, 0.0
    %v550 = vld [vmem:[#allocation6] sm:$0xf]
    %v551 = vld [vmem:[#allocation6 + $0x4] sm:$0xf]
    %v552 = vld [vmem:[#allocation6 + $0x8] sm:$0xf]
    %v553 = vld [vmem:[#allocation6 + $0xc] sm:$0xf]
    %v554 = vld [vmem:[#allocation6 + $0x10] sm:$0xf]
    %v555 = vld [vmem:[#allocation6 + $0x14] sm:$0xf]
    %v556 = vld [vmem:[#allocation6 + $0x18] sm:$0xf]
    %v557 = vld [vmem:[#allocation6 + $0x1c] sm:$0xf]
    %v558 = vld [vmem:[#allocation6 + $0x20] sm:$0xf]
    %v559 = vld [vmem:[#allocation6 + $0x24] sm:$0xf]
    %v560 = vld [vmem:[#allocation6 + $0x28] sm:$0xf]
    %v561 = vld [vmem:[#allocation6 + $0x2c] sm:$0xf]
    %v562 = vld [vmem:[#allocation6 + $0x30] sm:$0xf]
    %v563 = vld [vmem:[#allocation6 + $0x34] sm:$0xf]
    %v564 = vld [vmem:[#allocation6 + $0x38] sm:$0xf]
    %v565 = vld [vmem:[#allocation6 + $0x3c] sm:$0xf]
    %v566 = vld [vmem:[%s8] sm:$0x1]
    %v567 = vpack.c.bf16 %v549, %v549
    %v569 = vlaneseq
    %v570 = vshrl.u32 %v569, 7
    %v571 = vsub.s32 0, %v570
    %v572 = vrot.slane %v566, %v571
    %v590 = vunpack.c.l.b16 %v550
    %v591 = vunpack.c.l.b16 %v551
    %v592 = vunpack.c.l.b16 %v552
    %v593 = vunpack.c.l.b16 %v553
    %v594 = vunpack.c.l.b16 %v554
    %v595 = vunpack.c.l.b16 %v555
    %v596 = vunpack.c.l.b16 %v556
    %v597 = vunpack.c.l.b16 %v557
    %v598 = vunpack.c.l.b16 %v558
    %v599 = vunpack.c.l.b16 %v559
    %v600 = vunpack.c.l.b16 %v560
    %v601 = vunpack.c.l.b16 %v561
    %v602 = vunpack.c.l.b16 %v562
    %v603 = vunpack.c.l.b16 %v563
    %v604 = vunpack.c.l.b16 %v564
    %v605 = vunpack.c.l.b16 %v565
    %v606 = vpack.c.b16 %v591, %v590
    %v607 = vpack.c.b16 %v593, %v592
    %v608 = vpack.c.b16 %v595, %v594
    %v609 = vpack.c.b16 %v597, %v596
    %v610 = vpack.c.b16 %v599, %v598
    %v611 = vpack.c.b16 %v601, %v600
    %v612 = vpack.c.b16 %v603, %v602
    %v613 = vpack.c.b16 %v605, %v604
    %622 = vmatprep.subr.bf16.mxu0 0
    %623 = vmatpush1.bf16.msra.mxu0 %v606
    %624 = vmatprep.subr.bf16.mxu0 0
    %625 = vmatpush1.bf16.msra.mxu0 %v607
    %626 = vmatprep.subr.bf16.mxu0 0
    %627 = vmatpush1.bf16.msra.mxu0 %v608
    %628 = vmatprep.subr.bf16.mxu0 0
    %629 = vmatpush1.bf16.msra.mxu0 %v609
    %630 = vmatprep.subr.bf16.mxu0 0
    %631 = vmatpush1.bf16.msra.mxu0 %v610
    %632 = vmatprep.subr.bf16.mxu0 0
    %633 = vmatpush1.bf16.msra.mxu0 %v611
    %634 = vmatprep.subr.bf16.mxu0 0
    %635 = vmatpush1.bf16.msra.mxu0 %v612
    %636 = vmatprep.subr.bf16.mxu0 0
    %637 = vmatpush1.bf16.msra.mxu0 %v613
    %638 = vmatprep.subr.bf16.mxu0 0
    %639 = vmatpush1.bf16.msra.mxu0 0
    %640 = vmatprep.subr.bf16.mxu0 0
    %641 = vmatpush1.bf16.msra.mxu0 0
    %642 = vmatprep.subr.bf16.mxu0 0
    %643 = vmatpush1.bf16.msra.mxu0 0
    %644 = vmatprep.subr.bf16.mxu0 0
    %645 = vmatpush1.bf16.msra.mxu0 0
    %646 = vmatprep.subr.bf16.mxu0 0
    %647 = vmatpush1.bf16.msra.mxu0 0
    %648 = vmatprep.subr.bf16.mxu0 0
    %649 = vmatpush1.bf16.msra.mxu0 0
    %650 = vmatprep.subr.bf16.mxu0 0
    %651 = vmatpush1.bf16.msra.mxu0 0
    %652 = vmatprep.subr.bf16.mxu0 0
    %653 = vmatpush1.bf16.msra.mxu0 0
    %654 = vmatprep.mubr.bf16.mxu0 0
    %655 = vmatmul.mubr.bf16.gmra.mrb[0].mxu0 %v567
    %v656 = vpop.f32.mrb[0].mxu0
    %v657 = vadd.f32 %v572, %v656
    %v658 = vpop.f32.mrb[0].mxu0
    %v659 = vpop.f32.mrb[0].mxu0
    %v660 = vpop.f32.mrb[0].mxu0
    %661 = vdwg.mxu0
    %v662 = vmax.f32 %v657, 0.0
    %663 = vst [vmem:[%s12] sm:$0xff] %v662
    %v664 = vld [vmem:[#allocation7] sm:$0xf]
    %v665 = vld [vmem:[#allocation7 + $0x4] sm:$0xf]
    %v666 = vld [vmem:[#allocation7 + $0x8] sm:$0xf]
    %v667 = vld [vmem:[#allocation7 + $0xc] sm:$0xf]
    %v668 = vld [vmem:[#allocation7 + $0x10] sm:$0xf]
    %v669 = vld [vmem:[#allocation7 + $0x14] sm:$0xf]
    %v670 = vld [vmem:[#allocation7 + $0x18] sm:$0xf]
    %v671 = vld [vmem:[#allocation7 + $0x1c] sm:$0xf]
    %v672 = vld [vmem:[#allocation7 + $0x20] sm:$0xf]
    %v673 = vld [vmem:[#allocation7 + $0x24] sm:$0xf]
    %v674 = vld [vmem:[#allocation7 + $0x28] sm:$0xf]
    %v675 = vld [vmem:[#allocation7 + $0x2c] sm:$0xf]
    %v676 = vld [vmem:[#allocation7 + $0x30] sm:$0xf]
    %v677 = vld [vmem:[#allocation7 + $0x34] sm:$0xf]
    %v678 = vld [vmem:[#allocation7 + $0x38] sm:$0xf]
    %v679 = vld [vmem:[#allocation7 + $0x3c] sm:$0xf]
    %v680 = vld [vmem:[%s10] sm:$0x1]
    %v681 = vpack.c.bf16 %v662, %v662
    %v683 = vlaneseq
    %v684 = vshrl.u32 %v683, 7
    %v685 = vsub.s32 0, %v684
    %v686 = vrot.slane %v680, %v685
    %v704 = vunpack.c.l.b16 %v664
    %v705 = vunpack.c.l.b16 %v665
    %v706 = vunpack.c.l.b16 %v666
    %v707 = vunpack.c.l.b16 %v667
    %v708 = vunpack.c.l.b16 %v668
    %v709 = vunpack.c.l.b16 %v669
    %v710 = vunpack.c.l.b16 %v670
    %v711 = vunpack.c.l.b16 %v671
    %v712 = vunpack.c.l.b16 %v672
    %v713 = vunpack.c.l.b16 %v673
    %v714 = vunpack.c.l.b16 %v674
    %v715 = vunpack.c.l.b16 %v675
    %v716 = vunpack.c.l.b16 %v676
    %v717 = vunpack.c.l.b16 %v677
    %v718 = vunpack.c.l.b16 %v678
    %v719 = vunpack.c.l.b16 %v679
    %v720 = vpack.c.b16 %v705, %v704
    %v721 = vpack.c.b16 %v707, %v706
    %v722 = vpack.c.b16 %v709, %v708
    %v723 = vpack.c.b16 %v711, %v710
    %v724 = vpack.c.b16 %v713, %v712
    %v725 = vpack.c.b16 %v715, %v714
    %v726 = vpack.c.b16 %v717, %v716
    %v727 = vpack.c.b16 %v719, %v718
    %736 = vmatprep.subr.bf16.mxu0 0
    %737 = vmatpush1.bf16.msra.mxu0 %v720
    %738 = vmatprep.subr.bf16.mxu0 0
    %739 = vmatpush1.bf16.msra.mxu0 %v721
    %740 = vmatprep.subr.bf16.mxu0 0
    %741 = vmatpush1.bf16.msra.mxu0 %v722
    %742 = vmatprep.subr.bf16.mxu0 0
    %743 = vmatpush1.bf16.msra.mxu0 %v723
    %744 = vmatprep.subr.bf16.mxu0 0
    %745 = vmatpush1.bf16.msra.mxu0 %v724
    %746 = vmatprep.subr.bf16.mxu0 0
    %747 = vmatpush1.bf16.msra.mxu0 %v725
    %748 = vmatprep.subr.bf16.mxu0 0
    %749 = vmatpush1.bf16.msra.mxu0 %v726
    %750 = vmatprep.subr.bf16.mxu0 0
    %751 = vmatpush1.bf16.msra.mxu0 %v727
    %752 = vmatprep.subr.bf16.mxu0 0
    %753 = vmatpush1.bf16.msra.mxu0 0
    %754 = vmatprep.subr.bf16.mxu0 0
    %755 = vmatpush1.bf16.msra.mxu0 0
    %756 = vmatprep.subr.bf16.mxu0 0
    %757 = vmatpush1.bf16.msra.mxu0 0
    %758 = vmatprep.subr.bf16.mxu0 0
    %759 = vmatpush1.bf16.msra.mxu0 0
    %760 = vmatprep.subr.bf16.mxu0 0
    %761 = vmatpush1.bf16.msra.mxu0 0
    %762 = vmatprep.subr.bf16.mxu0 0
    %763 = vmatpush1.bf16.msra.mxu0 0
    %764 = vmatprep.subr.bf16.mxu0 0
    %765 = vmatpush1.bf16.msra.mxu0 0
    %766 = vmatprep.subr.bf16.mxu0 0
    %767 = vmatpush1.bf16.msra.mxu0 0
    %768 = vmatprep.mubr.bf16.mxu0 0
    %769 = vmatmul.mubr.bf16.gmra.mrb[0].mxu0 %v681
    %v770 = vpop.f32.mrb[0].mxu0
    %v771 = vadd.f32 %v686, %v770
    %v772 = vpop.f32.mrb[0].mxu0
    %v773 = vpop.f32.mrb[0].mxu0
    %v774 = vpop.f32.mrb[0].mxu0
    %775 = vdwg.mxu0
    %776 = vst [vmem:[%s11] sm:$0xff] %v771
    // Predicated region
    $region62: #{mlp_forward.1} parent=1 // pred_check
      _
    $region63: #{mlp_forward.1} parent=1 // pred_check_branch
      %778 = sbr.rel (0) target = $region65
    $region64: #{mlp_forward.1} parent=1 // pred_region
      _
    $region65: #{mlp_forward.1} parent=1 // pred_fallthru
      _
    // Predicated region
    $region66: #{mlp_forward.1} parent=1 // pred_check
      _
    $region67: #{mlp_forward.1} parent=1 // pred_check_branch
      %780 = sbr.rel (0) target = $region69
    $region68: #{mlp_forward.1} parent=1 // pred_region
      _
    $region69: #{mlp_forward.1} parent=1 // pred_fallthru
      _
    // Predicated region
    $region70: #{mlp_forward.1} parent=1 // pred_check
      _
    $region71: #{mlp_forward.1} parent=1 // pred_check_branch
      %782 = sbr.rel (0) target = $region73
    $region72: #{mlp_forward.1} parent=1 // pred_region
      _
    $region73: #{mlp_forward.1} parent=1 // pred_fallthru
      _
    // Predicated region
    $region74: #{mlp_forward.1} parent=1 // pred_check
      _
    $region75: #{mlp_forward.1} parent=1 // pred_check_branch
      %784 = sbr.rel (0) target = $region77
    $region76: #{mlp_forward.1} parent=1 // pred_region
      _
    $region77: #{mlp_forward.1} parent=1 // pred_fallthru
      _
    %785 = vsyncpa [#allocation3], 1
    %786 = vsyncpa [#allocation5], 1
    %787 = vsyncpa [#allocation8], 1

</llo_original>
